<compile_context>
chip_gen: v7x
topology: tpu7x:2x2x1
jax: 0.10.0
libtpu: 0.0.40
codegen_flags: <defaults>
</compile_context>

<pallas_src>
import functools

import jax
import jax.numpy as jnp
from jax import lax
from jax.experimental import pallas as pl
from jax.experimental.pallas import tpu as pltpu


def _delta_control_loss_kernel(pred_ref, targ_ref, loss_ref, dev_ref,
                               *, direction_weight, n_dir, n_grip):
    # Keep all intermediates in f32 (v5e VPU/EUP have no bf16 path).
    pred = pred_ref[...].astype(jnp.float32)            # (B, D)
    targ = targ_ref[...].astype(jnp.float32)            # (B, D)
    B, D = pred.shape

    col = lax.broadcasted_iota(jnp.int32, (B, D), 1)
    dir_mask = (col < n_dir).astype(jnp.float32)         # 1.0 on first 3 cols
    grip_mask = 1.0 - dir_mask                            # 1.0 on cols 3:

    # ---- direction part (cols 0:3) ----
    pd = pred * dir_mask
    td = targ * dir_mask

    p_ss = jnp.sum(pd * pd, axis=1, keepdims=True)       # (B, 1)  ||p||^2
    t_ss = jnp.sum(td * td, axis=1, keepdims=True)       # (B, 1)  ||t||^2

    # F.normalize(x, dim=1) = x / max(||x||, 1e-12):
    # single rsqrt on the clamped squared norm replaces sqrt + divide.
    p_inv = lax.rsqrt(jnp.maximum(p_ss, 1e-24))
    t_inv = lax.rsqrt(jnp.maximum(t_ss, 1e-24))
    pdn = pd * p_inv
    tdn = td * t_inv

    # magnitudes: sqrt(ss) == ss * rsqrt(ss)  (and exactly 0 at ss == 0)
    pmag = p_ss * p_inv
    tmag = t_ss * t_inv

    # pdn/tdn are unit-norm, so cosine similarity is just their dot product.
    # (Only differs from F.cosine_similarity for all-zero direction rows.)
    cos = jnp.sum(pdn * tdn, axis=1, keepdims=True)       # (B, 1)

    inv_b = 1.0 / B
    direction_loss = 1.0 - jnp.sum(cos) * inv_b
    mag_diff = pmag - tmag
    magnitude_loss = jnp.sum(mag_diff * mag_diff) * inv_b
    vector_loss = (direction_weight * direction_loss
                   + (1.0 - direction_weight) * magnitude_loss)

    # ---- gripper part (cols 3:) ----
    grip_diff = (pred - targ) * grip_mask
    mse_gripper = jnp.sum(grip_diff * grip_diff) * (1.0 / (B * n_grip))

    # Scalar loss straight to SMEM.
    loss_ref[0, 0] = vector_loss + mse_gripper

    # deviations = |pred_dir_normalized - target_dir_normalized|, emitted (B, 3)
    dev = jnp.abs(pdn - tdn)                              # gripper cols are 0
    dev_ref[...] = dev[:, :n_dir]


def delta_control_loss(predictions, targets, direction_weight=1.0):
    """predictions, targets: (B, D) float arrays, D >= 4."""
    B, D = predictions.shape
    assert D > 3, "DeltaControlLoss expects at least 4 action dims"
    n_dir = 3

    kernel = functools.partial(
        _delta_control_loss_kernel,
        direction_weight=float(direction_weight),
        n_dir=n_dir,
        n_grip=D - n_dir,
    )

    loss, deviations = pl.pallas_call(
        kernel,
        out_shape=(
            jax.ShapeDtypeStruct((1, 1), jnp.float32),
            jax.ShapeDtypeStruct((B, n_dir), jnp.float32),
        ),
        in_specs=[
            pl.BlockSpec(memory_space=pltpu.MemorySpace.VMEM),
            pl.BlockSpec(memory_space=pltpu.MemorySpace.VMEM),
        ],
        out_specs=(
            pl.BlockSpec(memory_space=pltpu.MemorySpace.SMEM),
            pl.BlockSpec(memory_space=pltpu.MemorySpace.VMEM),
        ),
    )(predictions, targets)

    total_loss = loss[0, 0]
    return total_loss, deviations

    # TODO(synk): if batch ever gets large / hot, switch to a lane-dense (D, B)
    # layout with a "parallel" grid over B chunks (v7x has 2 TCs); at B=8 the
    # kernel is pure fixed overhead and this is not worth it.


def _reference(predictions, targets, direction_weight=1.0):
    """Pure-JAX reference mirroring the PyTorch module."""
    pd = predictions[:, :3]
    td = targets[:, :3]
    pmag = jnp.linalg.norm(pd, axis=1, keepdims=True)
    tmag = jnp.linalg.norm(td, axis=1, keepdims=True)
    pdn = pd / jnp.maximum(pmag, 1e-12)
    tdn = td / jnp.maximum(tmag, 1e-12)
    pn = jnp.linalg.norm(pdn, axis=1)
    tn = jnp.linalg.norm(tdn, axis=1)
    cos = jnp.sum(pdn * tdn, axis=1) / (jnp.maximum(pn, 1e-8) * jnp.maximum(tn, 1e-8))
    direction_loss = 1.0 - jnp.mean(cos)
    magnitude_loss = jnp.mean((pmag - tmag) ** 2)
    vector_loss = (direction_weight * direction_loss
                   + (1.0 - direction_weight) * magnitude_loss)
    mse_gripper = jnp.mean((predictions[:, 3:] - targets[:, 3:]) ** 2)
    total = vector_loss + mse_gripper
    deviations = jnp.abs(pdn - tdn)
    return total, deviations


if __name__ == "__main__":
    key = jax.random.PRNGKey(0)
    k1, k2 = jax.random.split(key)

    B, D = 8, 7  # batch of 8 actions: 3 delta-translation dims + 4 gripper/rot dims
    predictions = jax.random.normal(k1, (B, D), dtype=jnp.float32)
    targets = jax.random.normal(k2, (B, D), dtype=jnp.float32)

    total_loss, deviations = delta_control_loss(predictions, targets,
                                                direction_weight=1.0)
    total_loss = jax.block_until_ready(total_loss)
    deviations = jax.block_until_ready(deviations)

    ref_loss, ref_dev = _reference(predictions, targets, direction_weight=1.0)
    assert jnp.allclose(total_loss, ref_loss, atol=1e-5, rtol=1e-5)
    assert jnp.allclose(deviations, ref_dev, atol=1e-5, rtol=1e-5)
    assert deviations.shape == (B, 3)

    print("KERNEL_OK")
</pallas_src>

<mosaic_0001>
module attributes {stable_mosaic.version = 11 : i64} {
  func.func @_delta_control_loss_kernel(%arg0: memref<8x7xf32, #tpu.memory_space<vmem>>, %arg1: memref<8x7xf32, #tpu.memory_space<vmem>>, %arg2: memref<1x1xf32, #tpu.memory_space<smem>>, %arg3: memref<8x3xf32, #tpu.memory_space<vmem>>) attributes {dimension_semantics = [], scalar_prefetch = 0 : i64, scratch_operands = 0 : i64, tpu.core_type = #tpu.core_type<tc>} {
    %c0 = arith.constant 0 : index
    %c0_0 = arith.constant 0 : index
    %0 = vector.load %arg0[%c0, %c0_0] : memref<8x7xf32, #tpu.memory_space<vmem>>, vector<8x7xf32>
    %c0_1 = arith.constant 0 : index
    %c0_2 = arith.constant 0 : index
    %1 = vector.load %arg1[%c0_1, %c0_2] : memref<8x7xf32, #tpu.memory_space<vmem>>, vector<8x7xf32>
    %2 = tpu.iota {dimensions = array<i32: 1>} : vector<8x7xi32>
    %c3_i32 = arith.constant 3 : i32
    %3 = vector.broadcast %c3_i32 : i32 to vector<8x7xi32>
    %4 = arith.cmpi slt, %2, %3 : vector<8x7xi32>
    %5 = arith.extui %4 : vector<8x7xi1> to vector<8x7xi32>
    %6 = arith.sitofp %5 : vector<8x7xi32> to vector<8x7xf32>
    %cst = arith.constant 1.000000e+00 : f32
    %7 = vector.broadcast %cst : f32 to vector<8x7xf32>
    %8 = arith.subf %7, %6 : vector<8x7xf32>
    %9 = arith.mulf %0, %6 : vector<8x7xf32>
    %10 = arith.mulf %1, %6 : vector<8x7xf32>
    %11 = arith.mulf %9, %9 : vector<8x7xf32>
    %cst_3 = arith.constant dense<0.000000e+00> : vector<8xf32>
    %12 = vector.multi_reduction <add>, %11, %cst_3 [1] : vector<8x7xf32> to vector<8xf32>
    %13 = vector.shape_cast %12 : vector<8xf32> to vector<8x1xf32>
    %14 = arith.mulf %10, %10 : vector<8x7xf32>
    %cst_4 = arith.constant dense<0.000000e+00> : vector<8xf32>
    %15 = vector.multi_reduction <add>, %14, %cst_4 [1] : vector<8x7xf32> to vector<8xf32>
    %16 = vector.shape_cast %15 : vector<8xf32> to vector<8x1xf32>
    %cst_5 = arith.constant 1.000000e-24 : f32
    %17 = vector.broadcast %cst_5 : f32 to vector<8x1xf32>
    %18 = arith.maximumf %13, %17 : vector<8x1xf32>
    %19 = math.rsqrt %18 : vector<8x1xf32>
    %cst_6 = arith.constant 1.000000e-24 : f32
    %20 = vector.broadcast %cst_6 : f32 to vector<8x1xf32>
    %21 = arith.maximumf %16, %20 : vector<8x1xf32>
    %22 = math.rsqrt %21 : vector<8x1xf32>
    %23 = vector.broadcast %19 : vector<8x1xf32> to vector<8x7xf32>
    %24 = arith.mulf %9, %23 : vector<8x7xf32>
    %25 = vector.broadcast %22 : vector<8x1xf32> to vector<8x7xf32>
    %26 = arith.mulf %10, %25 : vector<8x7xf32>
    %27 = arith.mulf %13, %19 : vector<8x1xf32>
    %28 = arith.mulf %16, %22 : vector<8x1xf32>
    %29 = arith.mulf %24, %26 : vector<8x7xf32>
    %cst_7 = arith.constant dense<0.000000e+00> : vector<8xf32>
    %30 = vector.multi_reduction <add>, %29, %cst_7 [1] : vector<8x7xf32> to vector<8xf32>
    %31 = vector.shape_cast %30 : vector<8xf32> to vector<8x1xf32>
    %32 = vector.shape_cast %31 : vector<8x1xf32> to vector<1x8x1xf32>
    %cst_8 = arith.constant dense<0.000000e+00> : vector<1xf32>
    %33 = vector.multi_reduction <add>, %32, %cst_8 [1, 2] : vector<1x8x1xf32> to vector<1xf32>
    %34 = vector.shape_cast %33 : vector<1xf32> to vector<1x1x1xf32>
    %35 = vector.extract %34[0, 0, 0] : f32 from vector<1x1x1xf32>
    %cst_9 = arith.constant 1.250000e-01 : f32
    %36 = arith.mulf %35, %cst_9 : f32
    %cst_10 = arith.constant 1.000000e+00 : f32
    %37 = arith.subf %cst_10, %36 : f32
    %38 = arith.subf %27, %28 : vector<8x1xf32>
    %39 = arith.mulf %38, %38 : vector<8x1xf32>
    %40 = vector.shape_cast %39 : vector<8x1xf32> to vector<1x8x1xf32>
    %cst_11 = arith.constant dense<0.000000e+00> : vector<1xf32>
    %41 = vector.multi_reduction <add>, %40, %cst_11 [1, 2] : vector<1x8x1xf32> to vector<1xf32>
    %42 = vector.shape_cast %41 : vector<1xf32> to vector<1x1x1xf32>
    %43 = vector.extract %42[0, 0, 0] : f32 from vector<1x1x1xf32>
    %cst_12 = arith.constant 1.250000e-01 : f32
    %44 = arith.mulf %43, %cst_12 : f32
    %cst_13 = arith.constant 1.000000e+00 : f32
    %45 = arith.mulf %cst_13, %37 : f32
    %cst_14 = arith.constant 0.000000e+00 : f32
    %46 = arith.mulf %cst_14, %44 : f32
    %47 = arith.addf %45, %46 : f32
    %48 = arith.subf %0, %1 : vector<8x7xf32>
    %49 = arith.mulf %48, %8 : vector<8x7xf32>
    %50 = arith.mulf %49, %49 : vector<8x7xf32>
    %51 = vector.shape_cast %50 : vector<8x7xf32> to vector<1x8x7xf32>
    %cst_15 = arith.constant dense<0.000000e+00> : vector<1xf32>
    %52 = vector.multi_reduction <add>, %51, %cst_15 [1, 2] : vector<1x8x7xf32> to vector<1xf32>
    %53 = vector.shape_cast %52 : vector<1xf32> to vector<1x1x1xf32>
    %54 = vector.extract %53[0, 0, 0] : f32 from vector<1x1x1xf32>
    %cst_16 = arith.constant 3.125000e-02 : f32
    %55 = arith.mulf %54, %cst_16 : f32
    %56 = arith.addf %47, %55 : f32
    %c0_17 = arith.constant 0 : index
    %c0_18 = arith.constant 0 : index
    %57 = memref.load %arg2[%c0_17, %c0_18] : memref<1x1xf32, #tpu.memory_space<smem>>
    memref.store %56, %arg2[%c0_17, %c0_18] : memref<1x1xf32, #tpu.memory_space<smem>>
    %58 = arith.subf %24, %26 : vector<8x7xf32>
    %59 = math.absf %58 : vector<8x7xf32>
    %60 = vector.extract_strided_slice %59 {offsets = [0, 0], sizes = [8, 3], strides = [1, 1]} : vector<8x7xf32> to vector<8x3xf32>
    %c0_19 = arith.constant 0 : index
    %c0_20 = arith.constant 0 : index
    %61 = vector.load %arg3[%c0_19, %c0_20] : memref<8x3xf32, #tpu.memory_space<vmem>>, vector<8x3xf32>
    tpu.vector_store %arg3[%c0_19, %c0_20], %60 {strides = array<i32>} : memref<8x3xf32, #tpu.memory_space<vmem>>, vector<8x3xf32>,
    return
  }
}

</mosaic_0001>

<llo_original>
// kernel: tpu_custom_call.1
$region0: #{tpu_custom_call.1}
  #allocation0 [shape = 'u32[]', space=smem, size = 0x4, offset = 0x4, fixed_abs, tag = 'smem constant byte address 0x4 - core index']
  #allocation1 [shape = 'u32[144,128]{1,0:T(1,128)}', space=vmem, size = 0x12000, scoped, tag = 'internal scratch']
  %s0 = inlined_call_operand.hbm [shape: f32[8,7], index: 0, kind: input, shape index: {}]
  %s1 = inlined_call_operand.hbm [shape: f32[8,7], index: 1, kind: input, shape index: {}]
  %s2 = inlined_call_operand.hbm [shape: f32[1,1], index: 2, kind: output, shape index: {0}]
  %s3 = inlined_call_operand.vmem [shape: f32[8,3], index: 3, kind: output, shape index: {1}]
  %4 = xla_tuple %s2, %s3
  %s5 = sld [smem:[#allocation0]]
  $region34: #{tpu_custom_call.1} parent=0
    _
  %s7 = ssub.s32 1, %s5
  %s8 = scalar_select 0, %s7, %s5
  $region1: #{tpu_custom_call.1} parent=0
    #allocation2 [shape = 'u8[4096]{0}', space=vmem, size = 0x1000, scoped, tag = 'input window, operand 0, single buffered']
    #allocation3 [shape = 's32[1]{0}', space=sflag, size = 0x4, scoped, tag = 'scoped memory for tpu_custom_call.1']
    #allocation4 [shape = 's32[1]{0}', space=sflag, size = 0x4, scoped, tag = 'scoped memory for tpu_custom_call.1']
    #allocation5 [shape = 'u8[4096]{0}', space=vmem, size = 0x1000, scoped, tag = 'input window, operand 1, single buffered']
    #allocation6 [shape = 's32[1]{0}', space=sflag, size = 0x4, scoped, tag = 'scoped memory for tpu_custom_call.1']
    #allocation7 [shape = 'u8[512]{0}', space=smem, size = 0x200, scoped, tag = 'output window, operand 0, single buffered']
    %9 = vsyncpa [#allocation3], 0
    %10 = vsyncpa [#allocation6], 0
    %11 = vsyncpa [#allocation4], 0
    // Predicated region
    $region2: #{tpu_custom_call.1} parent=1 // pred_check
      _
    $region3: #{tpu_custom_call.1} parent=1 // pred_check_branch
      %13 = sbr.rel (0) target = $region5
    $region4: #{tpu_custom_call.1} parent=1 // pred_region
      %s15 = ssub.s32 128, 128
      %16 = vsyncadd [#allocation3], %s15
      %s18 = sshll.u32 [#allocation2], 4
      %s19 = int_to_ptr.vmem [resolvable:$true] %s18
      %21 = dma.hbm_to_vmem [thread:$0]  %s0, 128, %s19, [#allocation3]
    $region5: #{tpu_custom_call.1} parent=1 // pred_fallthru
      _
    // Predicated region
    $region6: #{tpu_custom_call.1} parent=1 // pred_check
      _
    $region7: #{tpu_custom_call.1} parent=1 // pred_check_branch
      %23 = sbr.rel (0) target = $region9
    $region8: #{tpu_custom_call.1} parent=1 // pred_region
      %s25 = ssub.s32 128, 128
      %26 = vsyncadd [#allocation6], %s25
      %s28 = sshll.u32 [#allocation5], 4
      %s29 = int_to_ptr.vmem [resolvable:$true] %s28
      %31 = dma.hbm_to_vmem [thread:$0]  %s1, 128, %s29, [#allocation6]
    $region9: #{tpu_custom_call.1} parent=1 // pred_fallthru
      _
    // Predicated region
    $region10: #{tpu_custom_call.1} parent=1 // pred_check
      _
    $region11: #{tpu_custom_call.1} parent=1 // pred_check_branch
      %33 = sbr.rel (0) target = $region13
    $region12: #{tpu_custom_call.1} parent=1 // pred_region
      %34 = dma.done [#allocation3], 128
    $region13: #{tpu_custom_call.1} parent=1 // pred_fallthru
      _
    // Predicated region
    $region14: #{tpu_custom_call.1} parent=1 // pred_check
      _
    $region15: #{tpu_custom_call.1} parent=1 // pred_check_branch
      %36 = sbr.rel (0) target = $region17
    $region16: #{tpu_custom_call.1} parent=1 // pred_region
      %37 = dma.done [#allocation6], 128
    $region17: #{tpu_custom_call.1} parent=1 // pred_fallthru
      _
    %v38 = vld [vmem:[#allocation2] sm:$0xff]
    %v39 = vld [vmem:[#allocation5] sm:$0xff]
    %v40 = vlaneseq
    %v41 = vand.u32 %v40, 127
    %vm42 = vcmp.lt.s32.totalorder %v41, 3
    %v43 = vsel %vm42, 1, 0
    %v44 = vcvt.s32.f32 %v43
    %v45 = vsub.f32 1.0, %v44
    %v46 = vmul.f32 %v38, %v44
    %v47 = vmul.f32 %v39, %v44
    %v48 = vmul.f32 %v46, %v46
    %vm49 = vcmask 56320
    %v50 = vsel %vm49, %v48, 0.0
    %51 = vadd.xlane.f32.xlu0 %v50
    %v52 = vpop.xlane.xlu0 %51
    %v53 = vmul.f32 %v47, %v47
    %v54 = vsel %vm49, %v53, 0.0
    %55 = vadd.xlane.f32.xlu0 %v54
    %v56 = vpop.xlane.xlu0 %55
    %v57 = vmax.f32 %v52, 1e-24
    %v58 = vrsqrt.pop %v57
    %v59 = vmax.f32 %v56, 1e-24
    %v60 = vrsqrt.pop %v59
    %v61 = vmul.f32 %v46, %v58
    %v62 = vmul.f32 %v47, %v60
    %v63 = vmul.f32 %v52, %v58
    %v64 = vmul.f32 %v56, %v60
    %v65 = vmul.f32 %v61, %v62
    %v66 = vsel %vm49, %v65, 0.0
    %67 = vadd.xlane.f32.xlu0 %v66
    %v68 = vpop.xlane.xlu0 %67
    %vm69 = vcmask 7168
    %v70 = vsel %vm69, %v68, 0.0
    %71 = vadd.xlane.f32.xlu0 %v70
    %v72 = vpop.xlane.xlu0 %71
    %v73 = vrot.slane %v72, 4
    %v74 = vadd.f32 %v72, %v73
    %v75 = vrot.slane %v74, 2
    %v76 = vadd.f32 %v74, %v75
    %v77 = vrot.slane %v76, 1
    %v78 = vadd.f32 %v76, %v77
    %s79 = vtos %v78
    %s80 = smul.f32 %s79, 0.125
    %s81 = ssub.f32 1.0, %s80
    %v82 = vsub.f32 %v63, %v64
    %v83 = vmul.f32 %v82, %v82
    %v84 = vsel %vm69, %v83, 0.0
    %85 = vadd.xlane.f32.xlu0 %v84
    %v86 = vpop.xlane.xlu0 %85
    %v87 = vrot.slane %v86, 4
    %v88 = vadd.f32 %v86, %v87
    %v89 = vrot.slane %v88, 2
    %v90 = vadd.f32 %v88, %v89
    %v91 = vrot.slane %v90, 1
    %v92 = vadd.f32 %v90, %v91
    %s93 = vtos %v92
    %s94 = smul.f32 %s93, 0.125
    %s95 = smul.f32 %s94, 0.0
    %s96 = sadd.f32 %s81, %s95
    %v97 = vsub.f32 %v38, %v39
    %v98 = vmul.f32 %v97, %v45
    %v99 = vmul.f32 %v98, %v98
    %v100 = vsel %vm49, %v99, 0.0
    %101 = vadd.xlane.f32.xlu0 %v100
    %v102 = vpop.xlane.xlu0 %101
    %v103 = vrot.slane %v102, 4
    %v104 = vadd.f32 %v102, %v103
    %v105 = vrot.slane %v104, 2
    %v106 = vadd.f32 %v104, %v105
    %v107 = vrot.slane %v106, 1
    %v108 = vadd.f32 %v106, %v107
    %s109 = vtos %v108
    %s110 = smul.f32 %s109, 0.03125
    %s111 = sadd.f32 %s96, %s110
    %s112 = scalar_lea.smem [#allocation7], 0
    %113 = sst [smem:[%s112]] %s111
    %v114 = vsub.f32 %v61, %v62
    %v115 = vand.u32 2147483647, %v114
    %vm116 = vcmask 23552
    %117 = vst.msk [vmem:[%s3] sm:$0xff] %vm116, %v115
    // Predicated region
    $region18: #{tpu_custom_call.1} parent=1 // pred_check
      _
    $region19: #{tpu_custom_call.1} parent=1 // pred_check_branch
      %119 = sbr.rel (0) target = $region21
    $region20: #{tpu_custom_call.1} parent=1 // pred_region
      %s121 = ssub.s32 16, 16
      %122 = vsyncadd [#allocation4], %s121
      %125 = dma.smem_to_hbm [#allocation7], 16, %s2, [#allocation4]
    $region21: #{tpu_custom_call.1} parent=1 // pred_fallthru
      _
    // Predicated region
    $region22: #{tpu_custom_call.1} parent=1 // pred_check
      _
    $region23: #{tpu_custom_call.1} parent=1 // pred_check_branch
      %127 = sbr.rel (0) target = $region25
    $region24: #{tpu_custom_call.1} parent=1 // pred_region
      _
    $region25: #{tpu_custom_call.1} parent=1 // pred_fallthru
      _
    // Predicated region
    $region26: #{tpu_custom_call.1} parent=1 // pred_check
      _
    $region27: #{tpu_custom_call.1} parent=1 // pred_check_branch
      %129 = sbr.rel (0) target = $region29
    $region28: #{tpu_custom_call.1} parent=1 // pred_region
      %130 = dma.done [#allocation4], 16
    $region29: #{tpu_custom_call.1} parent=1 // pred_fallthru
      _
    // Predicated region
    $region30: #{tpu_custom_call.1} parent=1 // pred_check
      _
    $region31: #{tpu_custom_call.1} parent=1 // pred_check_branch
      %132 = sbr.rel (0) target = $region33
    $region32: #{tpu_custom_call.1} parent=1 // pred_region
      _
    $region33: #{tpu_custom_call.1} parent=1 // pred_fallthru
      _
    %133 = sfence
    %134 = vsyncpa [#allocation3], 1
    %135 = vsyncpa [#allocation6], 1
    %136 = vsyncpa [#allocation4], 1

</llo_original>
